<compile_context>
chip_gen: v7x
topology: tpu7x:2x2x1
jax: 0.10.0
libtpu: 0.0.40
codegen_flags: <defaults>
</compile_context>

<pallas_src>
import functools
import math

import jax
import jax.numpy as jnp
from jax.experimental import pallas as pl
from jax.experimental.pallas import tpu as pltpu

LANES = 128


def _round_up(x, m):
    return ((x + m - 1) // m) * m


# ----------------------------- Pallas kernel -----------------------------

def _patch_matmul_kernel(p_ref, w_ref, o_ref):
    """One row tile: (tm, Kpad) x (Kpad, Cpad) -> (tm, Cpad).

    p_ref: (tm, Kpad)   VMEM  im2col patch rows (lane-dense, bias column = 1.0)
    w_ref: (Kpad, Cpad) VMEM  folded conv weights (+ bias row), zero-padded
    o_ref: (tm, Cpad)   VMEM  lane-dense unmasked store; pad sliced off in wrapper
    """
    o_ref[...] = jnp.dot(p_ref[...], w_ref[...],
                         preferred_element_type=jnp.float32).astype(o_ref.dtype)


# ------------------------- weight construction glue -------------------------
# Exact replication of the PyTorch forward's weight assembly (cat along dim=-1
# of (O, I) slices, then reshape (O, I*K*K) -> (O, I, K, K)).

def _expand_weight(base, wt, K):
    O, I = base.shape[0], base.shape[1]
    base_clip = base[:, :, 1:-1, 1:-1].reshape(O, I, -1)
    pieces = []
    k = l = 0
    for i in range(K):
        for j in range(K):
            if j % 2 == 0 and i % 2 == 0:
                pieces.append(base_clip[:, :, l]); l += 1
            else:
                pieces.append(wt[:, :, k]); k += 1
    return jnp.concatenate(pieces, axis=-1).reshape(O, I, K, K)


# --------------------------------- wrapper ---------------------------------

@functools.partial(jax.jit,
                   static_argnames=("kernel_size", "num_row_tiles", "compute_dtype"))
def fpnse_conv_forward(x_nchw, w1, w2_t, w3_t, bias_t, kernel_size=5,
                       num_row_tiles=1, compute_dtype=None):
    """Returns (outputs NCHW, assembled weight OIHW) — same as the PyTorch module."""
    K = kernel_size
    O = w1.shape[0]
    N, Cin, H, W = x_nchw.shape
    Cout = 3 * O
    Ho, Wo = H - K + 1, W - K + 1
    # TODO(synk): stride/padding/dilation other than the module defaults (1, 0, 1)
    # are not implemented in this path.

    # ---- weight assembly (replicates the PyTorch forward exactly) ----
    w2 = _expand_weight(w1, w2_t, K)
    w3 = _expand_weight(w2, w3_t, K)
    w_full = jnp.concatenate([w1, w2, w3], axis=0)            # (Cout, Cin, K, K)
    bias = jnp.concatenate([bias_t, bias_t, bias_t])          # (Cout,)

    # ---- lane-dense MXU operands ----
    Kc = K * K * Cin                                          # 100 at toy shapes
    Kpad = _round_up(Kc + 1, LANES)                           # +1 row for folded bias
    Cpad = _round_up(Cout, LANES)

    # Weight rows ordered (ki, kj, cin) to match the patch-column order below;
    # bias folded into the first spare padded row (row Kc).
    w2d = jnp.transpose(w_full, (2, 3, 1, 0)).reshape(Kc, Cout)
    w2d = jnp.pad(w2d, ((0, Kpad - Kc), (0, Cpad - Cout)))
    w2d = w2d.at[Kc, :Cout].set(bias)

    # im2col in the jitted wrapper, reading NCHW directly (the layout change is
    # fused into the gather — no standalone NHWC transpose of x).
    taps = []
    for ki in range(K):
        for kj in range(K):
            taps.append(x_nchw[:, :, ki:ki + Ho, kj:kj + Wo])  # (N, Cin, Ho, Wo)
    patches = jnp.stack(taps, axis=1)                          # (N, K*K, Cin, Ho, Wo)
    patches = jnp.transpose(patches, (0, 3, 4, 1, 2))          # (N, Ho, Wo, K*K, Cin)
    patches = patches.reshape(N * Ho * Wo, Kc)
    # TODO(synk): at real FPN sizes (Cin~256, H,W>=64) do the im2col inside the
    # kernel with a row-tiled input block (1, th+K-1, W, Cin) instead of
    # materializing the (M, Kpad) patch matrix in HBM, and budget tiles against
    # v7x's 64 MiB VMEM; at these toy shapes the wrapper-side patch matrix is tiny.

    M = N * Ho * Wo
    num_row_tiles = max(1, min(int(num_row_tiles), pl.cdiv(M, 8)))
    tm = _round_up(pl.cdiv(M, num_row_tiles), 8)
    Mpad = tm * num_row_tiles

    patches = jnp.pad(patches, ((0, Mpad - M), (0, Kpad - Kc)))
    patches = patches.at[:, Kc].set(1.0)                       # bias column

    # Optional bf16 operands for v6e/v7x MXU throughput (accumulation stays f32).
    if compute_dtype is not None:
        patches = patches.astype(compute_dtype)
        w2d = w2d.astype(compute_dtype)

    elem = patches.dtype.itemsize
    cost = pl.CostEstimate(
        flops=2 * Mpad * Kpad * Cpad,
        transcendentals=0,
        bytes_accessed=(Mpad * Kpad + Kpad * Cpad) * elem
        + Mpad * Cpad * x_nchw.dtype.itemsize)

    out_flat = pl.pallas_call(
        _patch_matmul_kernel,
        out_shape=jax.ShapeDtypeStruct((Mpad, Cpad), x_nchw.dtype),
        grid=(num_row_tiles,),
        in_specs=[
            pl.BlockSpec((tm, Kpad), lambda i: (i, 0)),
            # Weight/bias operand: constant index_map -> fetched once across the
            # grid.  At production sizes also mark pipeline_mode=pl.Buffered(1)
            # to drop its redundant second VMEM buffer.
            pl.BlockSpec((Kpad, Cpad), lambda i: (0, 0)),
        ],
        out_specs=pl.BlockSpec((tm, Cpad), lambda i: (i, 0)),
        compiler_params=pltpu.CompilerParams(
            dimension_semantics=("parallel",)),
        cost_estimate=cost,
    )(patches, w2d)

    # Slice off row/lane padding, restore (N, Ho, Wo, Cout), then NCHW (API parity).
    out = out_flat[:M, :Cout].reshape(N, Ho, Wo, Cout)
    out_nchw = jnp.transpose(out, (0, 3, 1, 2))
    return out_nchw, w_full


def default_num_row_tiles():
    """2 'parallel' row tiles on dual-TensorCore v7x, 1 big step on v5e/v6e."""
    try:
        kind = jax.devices()[0].device_kind.lower()
    except Exception:
        return 1
    return 2 if ("v7" in kind or "7x" in kind) else 1


# ----------------------------- deterministic init -----------------------------

def init_params(key, in_channels, out_channels, K):
    k1, k2, k3, k4 = jax.random.split(key, 4)
    # kaiming_uniform_(a=sqrt(5)) => bound = 1/sqrt(fan_in)
    fan_in_w1 = in_channels * K * K
    b1 = 1.0 / math.sqrt(fan_in_w1)
    w1 = jax.random.uniform(k1, (out_channels, in_channels, K, K),
                            jnp.float32, -b1, b1)
    M = K * K - (K // 2 + 1) ** 2
    fan_in_t = in_channels * M
    bt = 1.0 / math.sqrt(fan_in_t)
    w2_t = jax.random.uniform(k2, (out_channels, in_channels, M),
                              jnp.float32, -bt, bt)
    w3_t = jax.random.uniform(k3, (out_channels, in_channels, M),
                              jnp.float32, -bt, bt)
    bias_t = jax.random.uniform(k4, (out_channels,), jnp.float32, -b1, b1)
    return w1, w2_t, w3_t, bias_t


# --------------------------------- main ---------------------------------

if __name__ == "__main__":
    in_channels, out_channels, K = 4, 8, 5
    N, H, W = 2, 16, 16

    key = jax.random.PRNGKey(0)
    kx, kp = jax.random.split(key)
    x = jax.random.normal(kx, (N, in_channels, H, W), jnp.float32)
    w1, w2_t, w3_t, bias_t = init_params(kp, in_channels, out_channels, K)

    out, w_full = fpnse_conv_forward(x, w1, w2_t, w3_t, bias_t, kernel_size=K,
                                     num_row_tiles=default_num_row_tiles())
    out = jax.block_until_ready(out)
    w_full = jax.block_until_ready(w_full)

    # Reference check against XLA conv (same semantics as F.conv2d), computed at
    # full f32 precision.
    bias_full = jnp.concatenate([bias_t, bias_t, bias_t])
    ref = jax.lax.conv_general_dilated(
        x, w_full, window_strides=(1, 1), padding="VALID",
        dimension_numbers=("NCHW", "OIHW", "NCHW"),
        precision=jax.lax.Precision.HIGHEST)
    ref = ref + bias_full[None, :, None, None]

    assert out.shape == (N, 3 * out_channels, H - K + 1, W - K + 1)
    assert w_full.shape == (3 * out_channels, in_channels, K, K)
    # Tolerance accommodates the MXU's default f32 contraction precision
    # (bf16-pass) relative to the HIGHEST-precision XLA reference; real
    # layout/semantics bugs would show up as O(1) errors.
    assert jnp.allclose(out, ref, atol=1e-2, rtol=1e-2), "mismatch vs reference conv"

    print("KERNEL_OK")
</pallas_src>

<mosaic_0001>
module attributes {stable_mosaic.version = 11 : i64} {
  func.func @_patch_matmul_kernel(%arg0: i32, %arg1: memref<288x128xf32, #tpu.memory_space<vmem>>, %arg2: memref<128x128xf32, #tpu.memory_space<vmem>>, %arg3: memref<288x128xf32, #tpu.memory_space<vmem>>) attributes {dimension_semantics = [#tpu.dimension_semantics<parallel>], iteration_bounds = array<i64: 1>, scalar_prefetch = 0 : i64, scratch_operands = 0 : i64, tpu.core_type = #tpu.core_type<tc>, window_params = [{transform_indices = @transform_0, window_bounds = array<i64: 288, 128>}, {pipeline_mode = #tpu.pipeline_mode<synchronous>, transform_indices = @transform_1, window_bounds = array<i64: 128, 128>}, {transform_indices = @transform_2, window_bounds = array<i64: 288, 128>}]} {
    %c0 = arith.constant 0 : index
    %c0_0 = arith.constant 0 : index
    %0 = vector.load %arg1[%c0, %c0_0] : memref<288x128xf32, #tpu.memory_space<vmem>>, vector<288x128xf32>
    %c0_1 = arith.constant 0 : index
    %c0_2 = arith.constant 0 : index
    %1 = vector.load %arg2[%c0_1, %c0_2] : memref<128x128xf32, #tpu.memory_space<vmem>>, vector<128x128xf32>
    %cst = arith.constant dense<0.000000e+00> : vector<288x128xf32>
    %2 = tpu.matmul %0, %1, %cst {dimension_numbers = #tpu.dot_dimension_numbers<[1], [0], [0], [1], [0, 0, 1, 1], [], []>} : vector<288x128xf32>, vector<128x128xf32>, vector<288x128xf32> -> vector<288x128xf32>
    %c0_3 = arith.constant 0 : index
    %c0_4 = arith.constant 0 : index
    %3 = vector.load %arg3[%c0_3, %c0_4] : memref<288x128xf32, #tpu.memory_space<vmem>>, vector<288x128xf32>
    tpu.vector_store %arg3[%c0_3, %c0_4], %2 {strides = array<i32>} : memref<288x128xf32, #tpu.memory_space<vmem>>, vector<288x128xf32>,
    return
  }
  func.func @transform_0(%arg0: i32) -> (i32, i32) {
    %c0_i32 = arith.constant 0 : i32
    %c0_i32_0 = arith.constant 0 : i32
    return %arg0, %c0_i32 : i32, i32
  }
  func.func @transform_1(%arg0: i32) -> (i32, i32) {
    %c0_i32 = arith.constant 0 : i32
    %c0_i32_0 = arith.constant 0 : i32
    %c0_i32_1 = arith.constant 0 : i32
    return %c0_i32, %c0_i32_0 : i32, i32
  }
  func.func @transform_2(%arg0: i32) -> (i32, i32) {
    %c0_i32 = arith.constant 0 : i32
    %c0_i32_0 = arith.constant 0 : i32
    return %arg0, %c0_i32 : i32, i32
  }
}

</mosaic_0001>

<llo_original>
// kernel: fpnse_conv_forward.1
$region0: #{fpnse_conv_forward.1}
  #allocation0 [shape = 'u32[]', space=smem, size = 0x4, offset = 0x4, fixed_abs, tag = 'smem constant byte address 0x4 - core index']
  #allocation1 [shape = 'u32[144,128]{1,0:T(1,128)}', space=vmem, size = 0x12000, scoped, tag = 'internal scratch']
  %s0 = inlined_call_operand.vmem [shape: f32[288,128], index: 0, kind: input, shape index: {}]
  %s1 = inlined_call_operand.vmem [shape: f32[128,128], index: 1, kind: input, shape index: {}]
  %s2 = inlined_call_operand.vmem [shape: f32[288,128], index: 2, kind: output, shape index: {}]
  %s3 = sld [smem:[#allocation0]]
  $region18: #{fpnse_conv_forward.1} parent=0
    _
  %s5 = ssub.s32 1, %s3
  %s6 = scalar_select 0, %s5, %s3
  // Predicated region
  $region2: #{fpnse_conv_forward.1} parent=0 // pred_check
    _
  $region3: #{fpnse_conv_forward.1} parent=0 // pred_check_branch
    %8 = sbr.rel (0) target = $region5
  $region4: #{fpnse_conv_forward.1} parent=0 // pred_region
    _
  $region5: #{fpnse_conv_forward.1} parent=0 // pred_fallthru
    _
  // Predicated region
  $region6: #{fpnse_conv_forward.1} parent=0 // pred_check
    _
  $region7: #{fpnse_conv_forward.1} parent=0 // pred_check_branch
    %10 = sbr.rel (0) target = $region9
  $region8: #{fpnse_conv_forward.1} parent=0 // pred_region
    _
  $region9: #{fpnse_conv_forward.1} parent=0 // pred_fallthru
    _
  %v11 = vld [vmem:[%s0] sm:$0xff]
  %v12 = vld [vmem:[%s0 + $0x8] sm:$0xff]
  %v13 = vld [vmem:[%s0 + $0x10] sm:$0xff]
  %v14 = vld [vmem:[%s0 + $0x18] sm:$0xff]
  %v15 = vld [vmem:[%s0 + $0x20] sm:$0xff]
  %v16 = vld [vmem:[%s0 + $0x28] sm:$0xff]
  %v17 = vld [vmem:[%s0 + $0x30] sm:$0xff]
  %v18 = vld [vmem:[%s0 + $0x38] sm:$0xff]
  %v19 = vld [vmem:[%s0 + $0x40] sm:$0xff]
  %v20 = vld [vmem:[%s0 + $0x48] sm:$0xff]
  %v21 = vld [vmem:[%s0 + $0x50] sm:$0xff]
  %v22 = vld [vmem:[%s0 + $0x58] sm:$0xff]
  %v23 = vld [vmem:[%s0 + $0x60] sm:$0xff]
  %v24 = vld [vmem:[%s0 + $0x68] sm:$0xff]
  %v25 = vld [vmem:[%s0 + $0x70] sm:$0xff]
  %v26 = vld [vmem:[%s0 + $0x78] sm:$0xff]
  %v27 = vld [vmem:[%s0 + $0x80] sm:$0xff]
  %v28 = vld [vmem:[%s0 + $0x88] sm:$0xff]
  %v29 = vld [vmem:[%s0 + $0x90] sm:$0xff]
  %v30 = vld [vmem:[%s0 + $0x98] sm:$0xff]
  %v31 = vld [vmem:[%s0 + $0xa0] sm:$0xff]
  %v32 = vld [vmem:[%s0 + $0xa8] sm:$0xff]
  %v33 = vld [vmem:[%s0 + $0xb0] sm:$0xff]
  %v34 = vld [vmem:[%s0 + $0xb8] sm:$0xff]
  %v35 = vld [vmem:[%s0 + $0xc0] sm:$0xff]
  %v36 = vld [vmem:[%s0 + $0xc8] sm:$0xff]
  %v37 = vld [vmem:[%s0 + $0xd0] sm:$0xff]
  %v38 = vld [vmem:[%s0 + $0xd8] sm:$0xff]
  %v39 = vld [vmem:[%s0 + $0xe0] sm:$0xff]
  %v40 = vld [vmem:[%s0 + $0xe8] sm:$0xff]
  %v41 = vld [vmem:[%s0 + $0xf0] sm:$0xff]
  %v42 = vld [vmem:[%s0 + $0xf8] sm:$0xff]
  %v43 = vld [vmem:[%s0 + $0x100] sm:$0xff]
  %v44 = vld [vmem:[%s0 + $0x108] sm:$0xff]
  %v45 = vld [vmem:[%s0 + $0x110] sm:$0xff]
  %v46 = vld [vmem:[%s0 + $0x118] sm:$0xff]
  %v47 = vld [vmem:[%s1] sm:$0xff]
  %v48 = vld [vmem:[%s1 + $0x8] sm:$0xff]
  %v49 = vld [vmem:[%s1 + $0x10] sm:$0xff]
  %v50 = vld [vmem:[%s1 + $0x18] sm:$0xff]
  %v51 = vld [vmem:[%s1 + $0x20] sm:$0xff]
  %v52 = vld [vmem:[%s1 + $0x28] sm:$0xff]
  %v53 = vld [vmem:[%s1 + $0x30] sm:$0xff]
  %v54 = vld [vmem:[%s1 + $0x38] sm:$0xff]
  %v55 = vld [vmem:[%s1 + $0x40] sm:$0xff]
  %v56 = vld [vmem:[%s1 + $0x48] sm:$0xff]
  %v57 = vld [vmem:[%s1 + $0x50] sm:$0xff]
  %v58 = vld [vmem:[%s1 + $0x58] sm:$0xff]
  %v59 = vld [vmem:[%s1 + $0x60] sm:$0xff]
  %v60 = vld [vmem:[%s1 + $0x68] sm:$0xff]
  %v61 = vld [vmem:[%s1 + $0x70] sm:$0xff]
  %v62 = vld [vmem:[%s1 + $0x78] sm:$0xff]
  %63 = vmatprep.subr.mxu0 0.0
  %64 = vmatpush1.msra.mxu0 %v47
  %65 = vmatprep.subr.mxu0 0.0
  %66 = vmatpush1.msra.mxu0 %v48
  %67 = vmatprep.subr.mxu0 0.0
  %68 = vmatpush1.msra.mxu0 %v49
  %69 = vmatprep.subr.mxu0 0.0
  %70 = vmatpush1.msra.mxu0 %v50
  %71 = vmatprep.subr.mxu0 0.0
  %72 = vmatpush1.msra.mxu0 %v51
  %73 = vmatprep.subr.mxu0 0.0
  %74 = vmatpush1.msra.mxu0 %v52
  %75 = vmatprep.subr.mxu0 0.0
  %76 = vmatpush1.msra.mxu0 %v53
  %77 = vmatprep.subr.mxu0 0.0
  %78 = vmatpush1.msra.mxu0 %v54
  %79 = vmatprep.subr.mxu0 0.0
  %80 = vmatpush1.msra.mxu0 %v55
  %81 = vmatprep.subr.mxu0 0.0
  %82 = vmatpush1.msra.mxu0 %v56
  %83 = vmatprep.subr.mxu0 0.0
  %84 = vmatpush1.msra.mxu0 %v57
  %85 = vmatprep.subr.mxu0 0.0
  %86 = vmatpush1.msra.mxu0 %v58
  %87 = vmatprep.subr.mxu0 0.0
  %88 = vmatpush1.msra.mxu0 %v59
  %89 = vmatprep.subr.mxu0 0.0
  %90 = vmatpush1.msra.mxu0 %v60
  %91 = vmatprep.subr.mxu0 0.0
  %92 = vmatpush1.msra.mxu0 %v61
  %93 = vmatprep.subr.mxu0 0.0
  %94 = vmatpush1.msra.mxu0 %v62
  %95 = vmatprep.subr.mxu0 0.0
  %96 = vmatpush1.msra.mxu0 0.0
  %97 = vmatprep.subr.mxu0 0.0
  %98 = vmatpush1.msra.mxu0 0.0
  %99 = vmatprep.subr.mxu0 0.0
  %100 = vmatpush1.msra.mxu0 0.0
  %101 = vmatprep.subr.mxu0 0.0
  %102 = vmatpush1.msra.mxu0 0.0
  %103 = vmatprep.subr.mxu0 0.0
  %104 = vmatpush1.msra.mxu0 0.0
  %105 = vmatprep.subr.mxu0 0.0
  %106 = vmatpush1.msra.mxu0 0.0
  %107 = vmatprep.subr.mxu0 0.0
  %108 = vmatpush1.msra.mxu0 0.0
  %109 = vmatprep.subr.mxu0 0.0
  %110 = vmatpush1.msra.mxu0 0.0
  %111 = vmatprep.subr.mxu0 0.0
  %112 = vmatpush1.msra.mxu0 0.0
  %113 = vmatprep.subr.mxu0 0.0
  %114 = vmatpush1.msra.mxu0 0.0
  %115 = vmatprep.subr.mxu0 0.0
  %116 = vmatpush1.msra.mxu0 0.0
  %117 = vmatprep.subr.mxu0 0.0
  %118 = vmatpush1.msra.mxu0 0.0
  %119 = vmatprep.subr.mxu0 0.0
  %120 = vmatpush1.msra.mxu0 0.0
  %121 = vmatprep.subr.mxu0 0.0
  %122 = vmatpush1.msra.mxu0 0.0
  %123 = vmatprep.subr.mxu0 0.0
  %124 = vmatpush1.msra.mxu0 0.0
  %125 = vmatprep.subr.mxu0 0.0
  %126 = vmatpush1.msra.mxu0 0.0
  %127 = vmatprep.mubr.f32.mxu0 0.0
  %128 = vmatmul.mubr.f32.gmra.mrb[0].mxu0 %v11
  %v129 = vpop.f32.mrb[0].mxu0
  %v130 = vadd.f32 0.0, %v129
  %v131 = vpop.f32.mrb[0].mxu0
  %132 = vmatprep.mubr.f32.mxu0 0.0
  %133 = vmatmul.mubr.f32.gmra.mrb[0].mxu0 %v12
  %v134 = vpop.f32.mrb[0].mxu0
  %v135 = vadd.f32 0.0, %v134
  %v136 = vpop.f32.mrb[0].mxu0
  %137 = vmatprep.mubr.f32.mxu0 0.0
  %138 = vmatmul.mubr.f32.gmra.mrb[0].mxu0 %v13
  %v139 = vpop.f32.mrb[0].mxu0
  %v140 = vadd.f32 0.0, %v139
  %v141 = vpop.f32.mrb[0].mxu0
  %142 = vmatprep.mubr.f32.mxu0 0.0
  %143 = vmatmul.mubr.f32.gmra.mrb[0].mxu0 %v14
  %v144 = vpop.f32.mrb[0].mxu0
  %v145 = vadd.f32 0.0, %v144
  %v146 = vpop.f32.mrb[0].mxu0
  %147 = vmatprep.mubr.f32.mxu0 0.0
  %148 = vmatmul.mubr.f32.gmra.mrb[0].mxu0 %v15
  %v149 = vpop.f32.mrb[0].mxu0
  %v150 = vadd.f32 0.0, %v149
  %v151 = vpop.f32.mrb[0].mxu0
  %152 = vmatprep.mubr.f32.mxu0 0.0
  %153 = vmatmul.mubr.f32.gmra.mrb[0].mxu0 %v16
  %v154 = vpop.f32.mrb[0].mxu0
  %v155 = vadd.f32 0.0, %v154
  %v156 = vpop.f32.mrb[0].mxu0
  %157 = vmatprep.mubr.f32.mxu0 0.0
  %158 = vmatmul.mubr.f32.gmra.mrb[0].mxu0 %v17
  %v159 = vpop.f32.mrb[0].mxu0
  %v160 = vadd.f32 0.0, %v159
  %v161 = vpop.f32.mrb[0].mxu0
  %162 = vmatprep.mubr.f32.mxu0 0.0
  %163 = vmatmul.mubr.f32.gmra.mrb[0].mxu0 %v18
  %v164 = vpop.f32.mrb[0].mxu0
  %v165 = vadd.f32 0.0, %v164
  %v166 = vpop.f32.mrb[0].mxu0
  %167 = vmatprep.mubr.f32.mxu0 0.0
  %168 = vmatmul.mubr.f32.gmra.mrb[0].mxu0 %v19
  %v169 = vpop.f32.mrb[0].mxu0
  %v170 = vadd.f32 0.0, %v169
  %v171 = vpop.f32.mrb[0].mxu0
  %172 = vmatprep.mubr.f32.mxu0 0.0
  %173 = vmatmul.mubr.f32.gmra.mrb[0].mxu0 %v20
  %v174 = vpop.f32.mrb[0].mxu0
  %v175 = vadd.f32 0.0, %v174
  %v176 = vpop.f32.mrb[0].mxu0
  %177 = vmatprep.mubr.f32.mxu0 0.0
  %178 = vmatmul.mubr.f32.gmra.mrb[0].mxu0 %v21
  %v179 = vpop.f32.mrb[0].mxu0
  %v180 = vadd.f32 0.0, %v179
  %v181 = vpop.f32.mrb[0].mxu0
  %182 = vmatprep.mubr.f32.mxu0 0.0
  %183 = vmatmul.mubr.f32.gmra.mrb[0].mxu0 %v22
  %v184 = vpop.f32.mrb[0].mxu0
  %v185 = vadd.f32 0.0, %v184
  %v186 = vpop.f32.mrb[0].mxu0
  %187 = vmatprep.mubr.f32.mxu0 0.0
  %188 = vmatmul.mubr.f32.gmra.mrb[0].mxu0 %v23
  %v189 = vpop.f32.mrb[0].mxu0
  %v190 = vadd.f32 0.0, %v189
  %v191 = vpop.f32.mrb[0].mxu0
  %192 = vmatprep.mubr.f32.mxu0 0.0
  %193 = vmatmul.mubr.f32.gmra.mrb[0].mxu0 %v24
  %v194 = vpop.f32.mrb[0].mxu0
  %v195 = vadd.f32 0.0, %v194
  %v196 = vpop.f32.mrb[0].mxu0
  %197 = vmatprep.mubr.f32.mxu0 0.0
  %198 = vmatmul.mubr.f32.gmra.mrb[0].mxu0 %v25
  %v199 = vpop.f32.mrb[0].mxu0
  %v200 = vadd.f32 0.0, %v199
  %v201 = vpop.f32.mrb[0].mxu0
  %202 = vmatprep.mubr.f32.mxu0 0.0
  %203 = vmatmul.mubr.f32.gmra.mrb[0].mxu0 %v26
  %v204 = vpop.f32.mrb[0].mxu0
  %v205 = vadd.f32 0.0, %v204
  %v206 = vpop.f32.mrb[0].mxu0
  %207 = vmatprep.mubr.f32.mxu0 0.0
  %208 = vmatmul.mubr.f32.gmra.mrb[0].mxu0 %v27
  %v209 = vpop.f32.mrb[0].mxu0
  %v210 = vadd.f32 0.0, %v209
  %v211 = vpop.f32.mrb[0].mxu0
  %212 = vmatprep.mubr.f32.mxu0 0.0
  %213 = vmatmul.mubr.f32.gmra.mrb[0].mxu0 %v28
  %v214 = vpop.f32.mrb[0].mxu0
  %v215 = vadd.f32 0.0, %v214
  %v216 = vpop.f32.mrb[0].mxu0
  %217 = vmatprep.mubr.f32.mxu0 0.0
  %218 = vmatmul.mubr.f32.gmra.mrb[0].mxu0 %v29
  %v219 = vpop.f32.mrb[0].mxu0
  %v220 = vadd.f32 0.0, %v219
  %v221 = vpop.f32.mrb[0].mxu0
  %222 = vmatprep.mubr.f32.mxu0 0.0
  %223 = vmatmul.mubr.f32.gmra.mrb[0].mxu0 %v30
  %v224 = vpop.f32.mrb[0].mxu0
  %v225 = vadd.f32 0.0, %v224
  %v226 = vpop.f32.mrb[0].mxu0
  %227 = vmatprep.mubr.f32.mxu0 0.0
  %228 = vmatmul.mubr.f32.gmra.mrb[0].mxu0 %v31
  %v229 = vpop.f32.mrb[0].mxu0
  %v230 = vadd.f32 0.0, %v229
  %v231 = vpop.f32.mrb[0].mxu0
  %232 = vmatprep.mubr.f32.mxu0 0.0
  %233 = vmatmul.mubr.f32.gmra.mrb[0].mxu0 %v32
  %v234 = vpop.f32.mrb[0].mxu0
  %v235 = vadd.f32 0.0, %v234
  %v236 = vpop.f32.mrb[0].mxu0
  %237 = vmatprep.mubr.f32.mxu0 0.0
  %238 = vmatmul.mubr.f32.gmra.mrb[0].mxu0 %v33
  %v239 = vpop.f32.mrb[0].mxu0
  %v240 = vadd.f32 0.0, %v239
  %v241 = vpop.f32.mrb[0].mxu0
  %242 = vmatprep.mubr.f32.mxu0 0.0
  %243 = vmatmul.mubr.f32.gmra.mrb[0].mxu0 %v34
  %v244 = vpop.f32.mrb[0].mxu0
  %v245 = vadd.f32 0.0, %v244
  %v246 = vpop.f32.mrb[0].mxu0
  %247 = vmatprep.mubr.f32.mxu0 0.0
  %248 = vmatmul.mubr.f32.gmra.mrb[0].mxu0 %v35
  %v249 = vpop.f32.mrb[0].mxu0
  %v250 = vadd.f32 0.0, %v249
  %v251 = vpop.f32.mrb[0].mxu0
  %252 = vmatprep.mubr.f32.mxu0 0.0
  %253 = vmatmul.mubr.f32.gmra.mrb[0].mxu0 %v36
  %v254 = vpop.f32.mrb[0].mxu0
  %v255 = vadd.f32 0.0, %v254
  %v256 = vpop.f32.mrb[0].mxu0
  %257 = vmatprep.mubr.f32.mxu0 0.0
  %258 = vmatmul.mubr.f32.gmra.mrb[0].mxu0 %v37
  %v259 = vpop.f32.mrb[0].mxu0
  %v260 = vadd.f32 0.0, %v259
  %v261 = vpop.f32.mrb[0].mxu0
  %262 = vmatprep.mubr.f32.mxu0 0.0
  %263 = vmatmul.mubr.f32.gmra.mrb[0].mxu0 %v38
  %v264 = vpop.f32.mrb[0].mxu0
  %v265 = vadd.f32 0.0, %v264
  %v266 = vpop.f32.mrb[0].mxu0
  %267 = vmatprep.mubr.f32.mxu0 0.0
  %268 = vmatmul.mubr.f32.gmra.mrb[0].mxu0 %v39
  %v269 = vpop.f32.mrb[0].mxu0
  %v270 = vadd.f32 0.0, %v269
  %v271 = vpop.f32.mrb[0].mxu0
  %272 = vmatprep.mubr.f32.mxu0 0.0
  %273 = vmatmul.mubr.f32.gmra.mrb[0].mxu0 %v40
  %v274 = vpop.f32.mrb[0].mxu0
  %v275 = vadd.f32 0.0, %v274
  %v276 = vpop.f32.mrb[0].mxu0
  %277 = vmatprep.mubr.f32.mxu0 0.0
  %278 = vmatmul.mubr.f32.gmra.mrb[0].mxu0 %v41
  %v279 = vpop.f32.mrb[0].mxu0
  %v280 = vadd.f32 0.0, %v279
  %v281 = vpop.f32.mrb[0].mxu0
  %282 = vmatprep.mubr.f32.mxu0 0.0
  %283 = vmatmul.mubr.f32.gmra.mrb[0].mxu0 %v42
  %v284 = vpop.f32.mrb[0].mxu0
  %v285 = vadd.f32 0.0, %v284
  %v286 = vpop.f32.mrb[0].mxu0
  %287 = vmatprep.mubr.f32.mxu0 0.0
  %288 = vmatmul.mubr.f32.gmra.mrb[0].mxu0 %v43
  %v289 = vpop.f32.mrb[0].mxu0
  %v290 = vadd.f32 0.0, %v289
  %v291 = vpop.f32.mrb[0].mxu0
  %292 = vmatprep.mubr.f32.mxu0 0.0
  %293 = vmatmul.mubr.f32.gmra.mrb[0].mxu0 %v44
  %v294 = vpop.f32.mrb[0].mxu0
  %v295 = vadd.f32 0.0, %v294
  %v296 = vpop.f32.mrb[0].mxu0
  %297 = vmatprep.mubr.f32.mxu0 0.0
  %298 = vmatmul.mubr.f32.gmra.mrb[0].mxu0 %v45
  %v299 = vpop.f32.mrb[0].mxu0
  %v300 = vadd.f32 0.0, %v299
  %v301 = vpop.f32.mrb[0].mxu0
  %302 = vmatprep.mubr.f32.mxu0 0.0
  %303 = vmatmul.mubr.f32.gmra.mrb[0].mxu0 %v46
  %v304 = vpop.f32.mrb[0].mxu0
  %v305 = vadd.f32 0.0, %v304
  %v306 = vpop.f32.mrb[0].mxu0
  %307 = vdwg.mxu0
  %308 = vst [vmem:[%s2] sm:$0xff] %v130
  %309 = vst [vmem:[%s2 + $0x8] sm:$0xff] %v135
  %310 = vst [vmem:[%s2 + $0x10] sm:$0xff] %v140
  %311 = vst [vmem:[%s2 + $0x18] sm:$0xff] %v145
  %312 = vst [vmem:[%s2 + $0x20] sm:$0xff] %v150
  %313 = vst [vmem:[%s2 + $0x28] sm:$0xff] %v155
  %314 = vst [vmem:[%s2 + $0x30] sm:$0xff] %v160
  %315 = vst [vmem:[%s2 + $0x38] sm:$0xff] %v165
  %316 = vst [vmem:[%s2 + $0x40] sm:$0xff] %v170
  %317 = vst [vmem:[%s2 + $0x48] sm:$0xff] %v175
  %318 = vst [vmem:[%s2 + $0x50] sm:$0xff] %v180
  %319 = vst [vmem:[%s2 + $0x58] sm:$0xff] %v185
  %320 = vst [vmem:[%s2 + $0x60] sm:$0xff] %v190
  %321 = vst [vmem:[%s2 + $0x68] sm:$0xff] %v195
  %322 = vst [vmem:[%s2 + $0x70] sm:$0xff] %v200
  %323 = vst [vmem:[%s2 + $0x78] sm:$0xff] %v205
  %324 = vst [vmem:[%s2 + $0x80] sm:$0xff] %v210
  %325 = vst [vmem:[%s2 + $0x88] sm:$0xff] %v215
  %326 = vst [vmem:[%s2 + $0x90] sm:$0xff] %v220
  %327 = vst [vmem:[%s2 + $0x98] sm:$0xff] %v225
  %328 = vst [vmem:[%s2 + $0xa0] sm:$0xff] %v230
  %329 = vst [vmem:[%s2 + $0xa8] sm:$0xff] %v235
  %330 = vst [vmem:[%s2 + $0xb0] sm:$0xff] %v240
  %331 = vst [vmem:[%s2 + $0xb8] sm:$0xff] %v245
  %332 = vst [vmem:[%s2 + $0xc0] sm:$0xff] %v250
  %333 = vst [vmem:[%s2 + $0xc8] sm:$0xff] %v255
  %334 = vst [vmem:[%s2 + $0xd0] sm:$0xff] %v260
  %335 = vst [vmem:[%s2 + $0xd8] sm:$0xff] %v265
  %336 = vst [vmem:[%s2 + $0xe0] sm:$0xff] %v270
  %337 = vst [vmem:[%s2 + $0xe8] sm:$0xff] %v275
  %338 = vst [vmem:[%s2 + $0xf0] sm:$0xff] %v280
  %339 = vst [vmem:[%s2 + $0xf8] sm:$0xff] %v285
  %340 = vst [vmem:[%s2 + $0x100] sm:$0xff] %v290
  %341 = vst [vmem:[%s2 + $0x108] sm:$0xff] %v295
  %342 = vst [vmem:[%s2 + $0x110] sm:$0xff] %v300
  %343 = vst [vmem:[%s2 + $0x118] sm:$0xff] %v305
  // Predicated region
  $region10: #{fpnse_conv_forward.1} parent=0 // pred_check
    _
  $region11: #{fpnse_conv_forward.1} parent=0 // pred_check_branch
    %345 = sbr.rel (0) target = $region13
  $region12: #{fpnse_conv_forward.1} parent=0 // pred_region
    _
  $region13: #{fpnse_conv_forward.1} parent=0 // pred_fallthru
    _
  // Predicated region
  $region14: #{fpnse_conv_forward.1} parent=0 // pred_check
    _
  $region15: #{fpnse_conv_forward.1} parent=0 // pred_check_branch
    %347 = sbr.rel (0) target = $region17
  $region16: #{fpnse_conv_forward.1} parent=0 // pred_region
    _
  $region17: #{fpnse_conv_forward.1} parent=0 // pred_fallthru
    _

</llo_original>
